<compile_context>
chip_gen: v5e
topology: v5e:2x2
jax: 0.10.0
libtpu: 0.0.40
codegen_flags: <defaults>
</compile_context>

<pallas_src>
import numpy as np
import jax
import jax.numpy as jnp
from jax import lax
from jax.experimental import pallas as pl
from jax.experimental.pallas import tpu as pltpu


# ---------------------------------------------------------------------------
# Deterministic parameter setup (mirrors SimpleState.__init__)
# ---------------------------------------------------------------------------
def hippo_skew_evals(N):
    """eigenvalues of (Hippo - Hippo.T)/2, largest imag part first (numpy)."""
    i = np.arange(N, dtype=np.float64)
    x = 2.0 * i + 1.0
    Hippo = np.sqrt(np.outer(x, x)) * np.tri(N, N, -1)  # strict lower triangle
    Skew = (Hippo - Hippo.T) / 2.0
    evals = np.linalg.eigvals(Skew)
    order = np.argsort(-evals.imag)
    return evals[order]


# ---------------------------------------------------------------------------
# Pallas kernel: one block of Bb batches per grid step, time-major layout.
#   x_ref      : [1, L*Bb, H]  input block (row = t*Bb + b)
#   inproj_ref : [H, N]
#   outproj_ref: [N, H]
#   lam_ref    : [2, N]        (real; imag) parts of the complex propagator
#   init_ref   : [Bb, N]       (real) initial state for the Bb batches
#   out_ref    : [1, L*Bb, H]  output block (time-major, same row order)
#   fs_ref     : [1, 2, Bb, N] final state (real; imag)
#   uconv_ref  : [L*Bb, N]     VMEM scratch (holds u, then conv.real in place)
# ---------------------------------------------------------------------------
def simple_state_kernel(x_ref, inproj_ref, outproj_ref, lam_ref, init_ref,
                        out_ref, fs_ref, uconv_ref):
    Bb, N = init_ref.shape
    L = uconv_ref.shape[0] // Bb

    # u = input @ in_projection  -- single fat MXU matmul, M = L*Bb.
    # (Keep f32 operands for exactness; bf16 operands would be faster on v5e
    #  but cost mantissa bits in the projections.)
    uconv_ref[...] = jnp.dot(x_ref[0], inproj_ref[...],
                             preferred_element_type=jnp.float32)     # [L*Bb, N]

    # Hoist the propagator broadcast out of the loop (JAX does not CSE it).
    lam = lam_ref[...]                                               # [2, N]
    lre = jnp.broadcast_to(lam[0:1, :], (Bb, N))                     # [Bb, N]
    lim = jnp.broadcast_to(lam[1:2, :], (Bb, N))                     # [Bb, N]

    s_re0 = init_ref[...]                                            # [Bb, N]
    s_im0 = jnp.zeros_like(s_re0)

    def body(t, carry):
        s_re, s_im = carry
        row = pl.multiple_of(t * Bb, Bb)           # aligned (8,128) tile start
        ut = uconv_ref[pl.ds(row, Bb), :]          # [Bb, N] full-vreg load
        new_re = lre * s_re - lim * s_im + ut      # u is real -> real add only
        new_im = lre * s_im + lim * s_re
        uconv_ref[pl.ds(row, Bb), :] = new_re      # store conv.real in place
        return (new_re, new_im)

    # Unrolled serial recurrence; state carry stays in vregs.
    s_re, s_im = lax.fori_loop(0, L, body, (s_re0, s_im0),
                               unroll=min(L, 8))

    # output = conv.real @ out_projection  -- single fat MXU matmul.
    out_ref[0] = jnp.dot(uconv_ref[...], outproj_ref[...],
                         preferred_element_type=jnp.float32)         # [L*Bb, H]

    # Merged final-state output: one contiguous (2, Bb, N) tile.
    fs_ref[0, 0, :, :] = s_re
    fs_ref[0, 1, :, :] = s_im


def simple_state_forward(x, in_proj, out_proj, lam_re, lam_im, init_state,
                         block_b=8):
    """x: [B, L, H] float32; init_state: [B, N] float32 (real).
    Returns (output [B, L, H] float32, final_state [B, 1, N] complex64)."""
    B, L, H = x.shape
    N = in_proj.shape[1]
    Bb = block_b
    B_pad = ((B + Bb - 1) // Bb) * Bb
    GB = B_pad // Bb

    x = x.astype(jnp.float32)
    init_state = init_state.astype(jnp.float32)
    if B_pad != B:
        x = jnp.pad(x, ((0, B_pad - B), (0, 0), (0, 0)))
        init_state = jnp.pad(init_state, ((0, B_pad - B), (0, 0)))

    # Pack Bb batches into the sublane axis, time-major within each block:
    # row (t*Bb + b) of block g holds batch (g*Bb + b) at time t.
    x_tm = (x.reshape(GB, Bb, L, H)
              .transpose(0, 2, 1, 3)                # [GB, L, Bb, H]
              .reshape(GB, L * Bb, H))              # [GB, L*Bb, H]
    lam = jnp.stack([lam_re, lam_im]).astype(jnp.float32)            # [2, N]

    flops = 4 * B_pad * L * H * N + 8 * B_pad * L * N
    bytes_accessed = 4 * (2 * B_pad * L * H + 2 * H * N + 2 * N + 3 * B_pad * N)

    out_tm, fs = pl.pallas_call(
        simple_state_kernel,
        out_shape=(
            jax.ShapeDtypeStruct((GB, L * Bb, H), jnp.float32),
            jax.ShapeDtypeStruct((GB, 2, Bb, N), jnp.float32),
        ),
        grid_spec=pltpu.PrefetchScalarGridSpec(
            num_scalar_prefetch=0,
            grid=(GB,),
            in_specs=[
                pl.BlockSpec((1, L * Bb, H), lambda g: (g, 0, 0)),   # x
                pl.BlockSpec((H, N), lambda g: (0, 0)),              # in_proj
                pl.BlockSpec((N, H), lambda g: (0, 0)),              # out_proj
                pl.BlockSpec((2, N), lambda g: (0, 0)),              # lambda
                pl.BlockSpec((Bb, N), lambda g: (g, 0)),             # init
            ],
            out_specs=(
                pl.BlockSpec((1, L * Bb, H), lambda g: (g, 0, 0)),   # output
                pl.BlockSpec((1, 2, Bb, N), lambda g: (g, 0, 0, 0)), # final st
            ),
            scratch_shapes=[pltpu.VMEM((L * Bb, N), jnp.float32)],
        ),
        compiler_params=pltpu.CompilerParams(
            dimension_semantics=("parallel",)),
        cost_estimate=pl.CostEstimate(flops=flops, transcendentals=0,
                                      bytes_accessed=bytes_accessed),
    )(x_tm, in_proj.astype(jnp.float32), out_proj.astype(jnp.float32),
      lam, init_state)

    # Undo the time-major / batch-block packing (pure XLA layout plumbing).
    out = (out_tm.reshape(GB, L, Bb, H)
                 .transpose(0, 2, 1, 3)
                 .reshape(B_pad, L, H)[:B])
    s_re = fs[:, 0].reshape(B_pad, N)[:B]
    s_im = fs[:, 1].reshape(B_pad, N)[:B]
    final_state = (s_re + 1j * s_im).astype(jnp.complex64)[:, None, :]
    return out, final_state


# ---------------------------------------------------------------------------
# Pure-JAX reference (same recurrence) for a correctness sanity check.
# ---------------------------------------------------------------------------
def reference_forward(x, in_proj, out_proj, lam_re, lam_im, init_state):
    u = jnp.einsum("blh,hn->bln", x, in_proj)                        # [B, L, N]
    lam = (lam_re + 1j * lam_im).astype(jnp.complex64)               # [N]
    s0 = init_state.astype(jnp.complex64)                            # [B, N]

    def step(s, ut):
        s = s * lam[None, :] + ut
        return s, s.real

    s_final, ys = lax.scan(step, s0,
                           jnp.transpose(u, (1, 0, 2)).astype(jnp.complex64))
    conv_re = jnp.transpose(ys, (1, 0, 2))                           # [B, L, N]
    out = jnp.einsum("bln,nh->blh", conv_re, out_proj)
    return out, s_final[:, None, :]


if __name__ == "__main__":
    # Small shapes consistent with the module: d_model=H, d_state=N.
    B, L, H, N = 2, 8, 32, 128
    real_init, scaling = -0.5, 1.0

    key = jax.random.PRNGKey(0)
    k1, k2, k3, k4 = jax.random.split(key, 4)
    default_initial = jax.random.normal(k1, (1, 1, N), jnp.float32)  # [1,1,N]
    in_projection = jax.random.normal(k2, (H, N), jnp.float32)       # [H,N]
    out_projection = jax.random.normal(k3, (N, H), jnp.float32)      # [N,H]
    x = jax.random.normal(k4, (B, L, H), jnp.float32)                # [B,L,H]

    # frequencies / decays exactly as in __init__
    frequencies = np.asarray(hippo_skew_evals(2 * N)[:N].imag,
                             dtype=np.float32) * scaling
    decays = np.full((N,), np.log(abs(real_init) * scaling + 1e-10),
                     dtype=np.float32)
    frequencies = jnp.asarray(frequencies)
    decays = jnp.asarray(decays)

    # propagator = exp(-exp(decays) + i*frequencies)
    mag = jnp.exp(-jnp.exp(decays))
    lam_re = mag * jnp.cos(frequencies)
    lam_im = mag * jnp.sin(frequencies)

    # initial_state=None path: tile default_initial over batch -> [B, N]
    init_state = jnp.tile(default_initial[:, 0, :], (B, 1))

    out, final_state = simple_state_forward(
        x, in_projection, out_projection, lam_re, lam_im, init_state)
    out = jax.block_until_ready(out)
    final_state = jax.block_until_ready(final_state)

    ref_out, ref_fs = reference_forward(
        x, in_projection, out_projection, lam_re, lam_im, init_state)
    ref_out = jax.block_until_ready(ref_out)
    ref_fs = jax.block_until_ready(ref_fs)

    rel_out = float(jnp.max(jnp.abs(out - ref_out)) /
                    (jnp.max(jnp.abs(ref_out)) + 1e-6))
    rel_fs = float(jnp.max(jnp.abs(final_state - ref_fs)) /
                   (jnp.max(jnp.abs(ref_fs)) + 1e-6))
    assert rel_out < 2e-2, f"output mismatch, rel err {rel_out}"
    assert rel_fs < 2e-2, f"final state mismatch, rel err {rel_fs}"

    print("KERNEL_OK")
</pallas_src>

<mosaic_0001>
module attributes {stable_mosaic.version = 11 : i64} {
  func.func @simple_state_kernel(%arg0: i32, %arg1: memref<1x64x32xf32, #tpu.memory_space<vmem>>, %arg2: memref<32x128xf32, #tpu.memory_space<vmem>>, %arg3: memref<128x32xf32, #tpu.memory_space<vmem>>, %arg4: memref<2x128xf32, #tpu.memory_space<vmem>>, %arg5: memref<8x128xf32, #tpu.memory_space<vmem>>, %arg6: memref<1x64x32xf32, #tpu.memory_space<vmem>>, %arg7: memref<1x2x8x128xf32, #tpu.memory_space<vmem>>, %arg8: memref<64x128xf32, #tpu.memory_space<vmem>>) attributes {dimension_semantics = [#tpu.dimension_semantics<parallel>], iteration_bounds = array<i64: 1>, scalar_prefetch = 0 : i64, scratch_operands = 1 : i64, tpu.core_type = #tpu.core_type<tc>, window_params = [{transform_indices = @transform_0, window_bounds = array<i64: 1, 64, 32>}, {pipeline_mode = #tpu.pipeline_mode<synchronous>, transform_indices = @transform_1, window_bounds = array<i64: 32, 128>}, {pipeline_mode = #tpu.pipeline_mode<synchronous>, transform_indices = @transform_2, window_bounds = array<i64: 128, 32>}, {pipeline_mode = #tpu.pipeline_mode<synchronous>, transform_indices = @transform_3, window_bounds = array<i64: 2, 128>}, {transform_indices = @transform_4, window_bounds = array<i64: 8, 128>}, {transform_indices = @transform_5, window_bounds = array<i64: 1, 64, 32>}, {transform_indices = @transform_6, window_bounds = array<i64: 1, 2, 8, 128>}]} {
    %c0 = arith.constant 0 : index
    %c0_0 = arith.constant 0 : index
    %c0_1 = arith.constant 0 : index
    %0 = vector.load %arg1[%c0, %c0_0, %c0_1] : memref<1x64x32xf32, #tpu.memory_space<vmem>>, vector<1x64x32xf32>
    %1 = vector.shape_cast %0 : vector<1x64x32xf32> to vector<64x32xf32>
    %c0_2 = arith.constant 0 : index
    %c0_3 = arith.constant 0 : index
    %2 = vector.load %arg2[%c0_2, %c0_3] : memref<32x128xf32, #tpu.memory_space<vmem>>, vector<32x128xf32>
    %cst = arith.constant dense<0.000000e+00> : vector<64x128xf32>
    %3 = tpu.matmul %1, %2, %cst {dimension_numbers = #tpu.dot_dimension_numbers<[1], [0], [0], [1], [0, 0, 1, 1], [], []>} : vector<64x32xf32>, vector<32x128xf32>, vector<64x128xf32> -> vector<64x128xf32>
    %c0_4 = arith.constant 0 : index
    %c0_5 = arith.constant 0 : index
    %4 = vector.load %arg8[%c0_4, %c0_5] : memref<64x128xf32, #tpu.memory_space<vmem>>, vector<64x128xf32>
    tpu.vector_store %arg8[%c0_4, %c0_5], %3 {strides = array<i32>} : memref<64x128xf32, #tpu.memory_space<vmem>>, vector<64x128xf32>,
    %c0_6 = arith.constant 0 : index
    %c0_7 = arith.constant 0 : index
    %5 = vector.load %arg4[%c0_6, %c0_7] : memref<2x128xf32, #tpu.memory_space<vmem>>, vector<2x128xf32>
    %6 = vector.extract_strided_slice %5 {offsets = [0, 0], sizes = [1, 128], strides = [1, 1]} : vector<2x128xf32> to vector<1x128xf32>
    %7 = vector.shape_cast %6 : vector<1x128xf32> to vector<1x128xf32>
    %8 = vector.broadcast %7 : vector<1x128xf32> to vector<8x128xf32>
    %9 = vector.extract_strided_slice %5 {offsets = [1, 0], sizes = [1, 128], strides = [1, 1]} : vector<2x128xf32> to vector<1x128xf32>
    %10 = vector.shape_cast %9 : vector<1x128xf32> to vector<1x128xf32>
    %11 = vector.broadcast %10 : vector<1x128xf32> to vector<8x128xf32>
    %c0_8 = arith.constant 0 : index
    %c0_9 = arith.constant 0 : index
    %12 = vector.load %arg5[%c0_8, %c0_9] : memref<8x128xf32, #tpu.memory_space<vmem>>, vector<8x128xf32>
    %cst_10 = arith.constant 0.000000e+00 : f32
    %13 = vector.broadcast %cst_10 : f32 to vector<8x128xf32>
    %c0_i32 = arith.constant 0 : i32
    %c8_i32 = arith.constant 8 : i32
    %14 = arith.muli %c0_i32, %c8_i32 : i32
    %15 = tpu.assume_multiple %14, 8 : i32
    %16 = arith.index_cast %15 : i32 to index
    %c0_11 = arith.constant 0 : index
    %17 = vector.load %arg8[%16, %c0_11] : memref<64x128xf32, #tpu.memory_space<vmem>>, vector<8x128xf32>
    %18 = arith.mulf %8, %12 : vector<8x128xf32>
    %19 = arith.mulf %11, %13 : vector<8x128xf32>
    %20 = arith.subf %18, %19 : vector<8x128xf32>
    %21 = arith.addf %20, %17 : vector<8x128xf32>
    %22 = arith.mulf %8, %13 : vector<8x128xf32>
    %23 = arith.mulf %11, %12 : vector<8x128xf32>
    %24 = arith.addf %22, %23 : vector<8x128xf32>
    %25 = arith.index_cast %15 : i32 to index
    %c0_12 = arith.constant 0 : index
    %26 = vector.load %arg8[%25, %c0_12] : memref<64x128xf32, #tpu.memory_space<vmem>>, vector<8x128xf32>
    tpu.vector_store %arg8[%25, %c0_12], %21 {strides = array<i32>} : memref<64x128xf32, #tpu.memory_space<vmem>>, vector<8x128xf32>,
    %c1_i32 = arith.constant 1 : i32
    %c8_i32_13 = arith.constant 8 : i32
    %27 = arith.muli %c1_i32, %c8_i32_13 : i32
    %28 = tpu.assume_multiple %27, 8 : i32
    %29 = arith.index_cast %28 : i32 to index
    %c0_14 = arith.constant 0 : index
    %30 = vector.load %arg8[%29, %c0_14] : memref<64x128xf32, #tpu.memory_space<vmem>>, vector<8x128xf32>
    %31 = arith.mulf %8, %21 : vector<8x128xf32>
    %32 = arith.mulf %11, %24 : vector<8x128xf32>
    %33 = arith.subf %31, %32 : vector<8x128xf32>
    %34 = arith.addf %33, %30 : vector<8x128xf32>
    %35 = arith.mulf %8, %24 : vector<8x128xf32>
    %36 = arith.mulf %11, %21 : vector<8x128xf32>
    %37 = arith.addf %35, %36 : vector<8x128xf32>
    %38 = arith.index_cast %28 : i32 to index
    %c0_15 = arith.constant 0 : index
    %39 = vector.load %arg8[%38, %c0_15] : memref<64x128xf32, #tpu.memory_space<vmem>>, vector<8x128xf32>
    tpu.vector_store %arg8[%38, %c0_15], %34 {strides = array<i32>} : memref<64x128xf32, #tpu.memory_space<vmem>>, vector<8x128xf32>,
    %c2_i32 = arith.constant 2 : i32
    %c8_i32_16 = arith.constant 8 : i32
    %40 = arith.muli %c2_i32, %c8_i32_16 : i32
    %41 = tpu.assume_multiple %40, 8 : i32
    %42 = arith.index_cast %41 : i32 to index
    %c0_17 = arith.constant 0 : index
    %43 = vector.load %arg8[%42, %c0_17] : memref<64x128xf32, #tpu.memory_space<vmem>>, vector<8x128xf32>
    %44 = arith.mulf %8, %34 : vector<8x128xf32>
    %45 = arith.mulf %11, %37 : vector<8x128xf32>
    %46 = arith.subf %44, %45 : vector<8x128xf32>
    %47 = arith.addf %46, %43 : vector<8x128xf32>
    %48 = arith.mulf %8, %37 : vector<8x128xf32>
    %49 = arith.mulf %11, %34 : vector<8x128xf32>
    %50 = arith.addf %48, %49 : vector<8x128xf32>
    %51 = arith.index_cast %41 : i32 to index
    %c0_18 = arith.constant 0 : index
    %52 = vector.load %arg8[%51, %c0_18] : memref<64x128xf32, #tpu.memory_space<vmem>>, vector<8x128xf32>
    tpu.vector_store %arg8[%51, %c0_18], %47 {strides = array<i32>} : memref<64x128xf32, #tpu.memory_space<vmem>>, vector<8x128xf32>,
    %c3_i32 = arith.constant 3 : i32
    %c8_i32_19 = arith.constant 8 : i32
    %53 = arith.muli %c3_i32, %c8_i32_19 : i32
    %54 = tpu.assume_multiple %53, 8 : i32
    %55 = arith.index_cast %54 : i32 to index
    %c0_20 = arith.constant 0 : index
    %56 = vector.load %arg8[%55, %c0_20] : memref<64x128xf32, #tpu.memory_space<vmem>>, vector<8x128xf32>
    %57 = arith.mulf %8, %47 : vector<8x128xf32>
    %58 = arith.mulf %11, %50 : vector<8x128xf32>
    %59 = arith.subf %57, %58 : vector<8x128xf32>
    %60 = arith.addf %59, %56 : vector<8x128xf32>
    %61 = arith.mulf %8, %50 : vector<8x128xf32>
    %62 = arith.mulf %11, %47 : vector<8x128xf32>
    %63 = arith.addf %61, %62 : vector<8x128xf32>
    %64 = arith.index_cast %54 : i32 to index
    %c0_21 = arith.constant 0 : index
    %65 = vector.load %arg8[%64, %c0_21] : memref<64x128xf32, #tpu.memory_space<vmem>>, vector<8x128xf32>
    tpu.vector_store %arg8[%64, %c0_21], %60 {strides = array<i32>} : memref<64x128xf32, #tpu.memory_space<vmem>>, vector<8x128xf32>,
    %c4_i32 = arith.constant 4 : i32
    %c8_i32_22 = arith.constant 8 : i32
    %66 = arith.muli %c4_i32, %c8_i32_22 : i32
    %67 = tpu.assume_multiple %66, 8 : i32
    %68 = arith.index_cast %67 : i32 to index
    %c0_23 = arith.constant 0 : index
    %69 = vector.load %arg8[%68, %c0_23] : memref<64x128xf32, #tpu.memory_space<vmem>>, vector<8x128xf32>
    %70 = arith.mulf %8, %60 : vector<8x128xf32>
    %71 = arith.mulf %11, %63 : vector<8x128xf32>
    %72 = arith.subf %70, %71 : vector<8x128xf32>
    %73 = arith.addf %72, %69 : vector<8x128xf32>
    %74 = arith.mulf %8, %63 : vector<8x128xf32>
    %75 = arith.mulf %11, %60 : vector<8x128xf32>
    %76 = arith.addf %74, %75 : vector<8x128xf32>
    %77 = arith.index_cast %67 : i32 to index
    %c0_24 = arith.constant 0 : index
    %78 = vector.load %arg8[%77, %c0_24] : memref<64x128xf32, #tpu.memory_space<vmem>>, vector<8x128xf32>
    tpu.vector_store %arg8[%77, %c0_24], %73 {strides = array<i32>} : memref<64x128xf32, #tpu.memory_space<vmem>>, vector<8x128xf32>,
    %c5_i32 = arith.constant 5 : i32
    %c8_i32_25 = arith.constant 8 : i32
    %79 = arith.muli %c5_i32, %c8_i32_25 : i32
    %80 = tpu.assume_multiple %79, 8 : i32
    %81 = arith.index_cast %80 : i32 to index
    %c0_26 = arith.constant 0 : index
    %82 = vector.load %arg8[%81, %c0_26] : memref<64x128xf32, #tpu.memory_space<vmem>>, vector<8x128xf32>
    %83 = arith.mulf %8, %73 : vector<8x128xf32>
    %84 = arith.mulf %11, %76 : vector<8x128xf32>
    %85 = arith.subf %83, %84 : vector<8x128xf32>
    %86 = arith.addf %85, %82 : vector<8x128xf32>
    %87 = arith.mulf %8, %76 : vector<8x128xf32>
    %88 = arith.mulf %11, %73 : vector<8x128xf32>
    %89 = arith.addf %87, %88 : vector<8x128xf32>
    %90 = arith.index_cast %80 : i32 to index
    %c0_27 = arith.constant 0 : index
    %91 = vector.load %arg8[%90, %c0_27] : memref<64x128xf32, #tpu.memory_space<vmem>>, vector<8x128xf32>
    tpu.vector_store %arg8[%90, %c0_27], %86 {strides = array<i32>} : memref<64x128xf32, #tpu.memory_space<vmem>>, vector<8x128xf32>,
    %c6_i32 = arith.constant 6 : i32
    %c8_i32_28 = arith.constant 8 : i32
    %92 = arith.muli %c6_i32, %c8_i32_28 : i32
    %93 = tpu.assume_multiple %92, 8 : i32
    %94 = arith.index_cast %93 : i32 to index
    %c0_29 = arith.constant 0 : index
    %95 = vector.load %arg8[%94, %c0_29] : memref<64x128xf32, #tpu.memory_space<vmem>>, vector<8x128xf32>
    %96 = arith.mulf %8, %86 : vector<8x128xf32>
    %97 = arith.mulf %11, %89 : vector<8x128xf32>
    %98 = arith.subf %96, %97 : vector<8x128xf32>
    %99 = arith.addf %98, %95 : vector<8x128xf32>
    %100 = arith.mulf %8, %89 : vector<8x128xf32>
    %101 = arith.mulf %11, %86 : vector<8x128xf32>
    %102 = arith.addf %100, %101 : vector<8x128xf32>
    %103 = arith.index_cast %93 : i32 to index
    %c0_30 = arith.constant 0 : index
    %104 = vector.load %arg8[%103, %c0_30] : memref<64x128xf32, #tpu.memory_space<vmem>>, vector<8x128xf32>
    tpu.vector_store %arg8[%103, %c0_30], %99 {strides = array<i32>} : memref<64x128xf32, #tpu.memory_space<vmem>>, vector<8x128xf32>,
    %c7_i32 = arith.constant 7 : i32
    %c8_i32_31 = arith.constant 8 : i32
    %105 = arith.muli %c7_i32, %c8_i32_31 : i32
    %106 = tpu.assume_multiple %105, 8 : i32
    %107 = arith.index_cast %106 : i32 to index
    %c0_32 = arith.constant 0 : index
    %108 = vector.load %arg8[%107, %c0_32] : memref<64x128xf32, #tpu.memory_space<vmem>>, vector<8x128xf32>
    %109 = arith.mulf %8, %99 : vector<8x128xf32>
    %110 = arith.mulf %11, %102 : vector<8x128xf32>
    %111 = arith.subf %109, %110 : vector<8x128xf32>
    %112 = arith.addf %111, %108 : vector<8x128xf32>
    %113 = arith.mulf %8, %102 : vector<8x128xf32>
    %114 = arith.mulf %11, %99 : vector<8x128xf32>
    %115 = arith.addf %113, %114 : vector<8x128xf32>
    %116 = arith.index_cast %106 : i32 to index
    %c0_33 = arith.constant 0 : index
    %117 = vector.load %arg8[%116, %c0_33] : memref<64x128xf32, #tpu.memory_space<vmem>>, vector<8x128xf32>
    tpu.vector_store %arg8[%116, %c0_33], %112 {strides = array<i32>} : memref<64x128xf32, #tpu.memory_space<vmem>>, vector<8x128xf32>,
    %c8_i32_34 = arith.constant 8 : i32
    %c0_35 = arith.constant 0 : index
    %c0_36 = arith.constant 0 : index
    %118 = vector.load %arg8[%c0_35, %c0_36] : memref<64x128xf32, #tpu.memory_space<vmem>>, vector<64x128xf32>
    %c0_37 = arith.constant 0 : index
    %c0_38 = arith.constant 0 : index
    %119 = vector.load %arg3[%c0_37, %c0_38] : memref<128x32xf32, #tpu.memory_space<vmem>>, vector<128x32xf32>
    %cst_39 = arith.constant dense<0.000000e+00> : vector<64x32xf32>
    %120 = tpu.matmul %118, %119, %cst_39 {dimension_numbers = #tpu.dot_dimension_numbers<[1], [0], [0], [1], [0, 0, 1, 1], [], []>} : vector<64x128xf32>, vector<128x32xf32>, vector<64x32xf32> -> vector<64x32xf32>
    %c0_40 = arith.constant 0 : index
    %c0_41 = arith.constant 0 : index
    %c0_42 = arith.constant 0 : index
    %121 = vector.load %arg6[%c0_40, %c0_41, %c0_42] : memref<1x64x32xf32, #tpu.memory_space<vmem>>, vector<1x64x32xf32>
    %122 = vector.shape_cast %121 : vector<1x64x32xf32> to vector<64x32xf32>
    %123 = vector.shape_cast %120 : vector<64x32xf32> to vector<1x64x32xf32>
    tpu.vector_store %arg6[%c0_40, %c0_41, %c0_42], %123 {strides = array<i32>} : memref<1x64x32xf32, #tpu.memory_space<vmem>>, vector<1x64x32xf32>,
    %c0_43 = arith.constant 0 : index
    %c0_44 = arith.constant 0 : index
    %c0_45 = arith.constant 0 : index
    %c0_46 = arith.constant 0 : index
    %124 = vector.load %arg7[%c0_43, %c0_44, %c0_45, %c0_46] : memref<1x2x8x128xf32, #tpu.memory_space<vmem>>, vector<1x1x8x128xf32>
    %125 = vector.shape_cast %124 : vector<1x1x8x128xf32> to vector<8x128xf32>
    %126 = vector.shape_cast %112 : vector<8x128xf32> to vector<1x1x8x128xf32>
    tpu.vector_store %arg7[%c0_43, %c0_44, %c0_45, %c0_46], %126 {strides = array<i32>} : memref<1x2x8x128xf32, #tpu.memory_space<vmem>>, vector<1x1x8x128xf32>,
    %c0_47 = arith.constant 0 : index
    %c1 = arith.constant 1 : index
    %c0_48 = arith.constant 0 : index
    %c0_49 = arith.constant 0 : index
    %127 = vector.load %arg7[%c0_47, %c1, %c0_48, %c0_49] : memref<1x2x8x128xf32, #tpu.memory_space<vmem>>, vector<1x1x8x128xf32>
    %128 = vector.shape_cast %127 : vector<1x1x8x128xf32> to vector<8x128xf32>
    %129 = vector.shape_cast %115 : vector<8x128xf32> to vector<1x1x8x128xf32>
    tpu.vector_store %arg7[%c0_47, %c1, %c0_48, %c0_49], %129 {strides = array<i32>} : memref<1x2x8x128xf32, #tpu.memory_space<vmem>>, vector<1x1x8x128xf32>,
    return
  }
  func.func @transform_0(%arg0: i32) -> (i32, i32, i32) {
    %c0_i32 = arith.constant 0 : i32
    %c0_i32_0 = arith.constant 0 : i32
    %c0_i32_1 = arith.constant 0 : i32
    return %arg0, %c0_i32, %c0_i32_0 : i32, i32, i32
  }
  func.func @transform_1(%arg0: i32) -> (i32, i32) {
    %c0_i32 = arith.constant 0 : i32
    %c0_i32_0 = arith.constant 0 : i32
    %c0_i32_1 = arith.constant 0 : i32
    return %c0_i32, %c0_i32_0 : i32, i32
  }
  func.func @transform_2(%arg0: i32) -> (i32, i32) {
    %c0_i32 = arith.constant 0 : i32
    %c0_i32_0 = arith.constant 0 : i32
    %c0_i32_1 = arith.constant 0 : i32
    return %c0_i32, %c0_i32_0 : i32, i32
  }
  func.func @transform_3(%arg0: i32) -> (i32, i32) {
    %c0_i32 = arith.constant 0 : i32
    %c0_i32_0 = arith.constant 0 : i32
    %c0_i32_1 = arith.constant 0 : i32
    return %c0_i32, %c0_i32_0 : i32, i32
  }
  func.func @transform_4(%arg0: i32) -> (i32, i32) {
    %c0_i32 = arith.constant 0 : i32
    %c0_i32_0 = arith.constant 0 : i32
    return %arg0, %c0_i32 : i32, i32
  }
  func.func @transform_5(%arg0: i32) -> (i32, i32, i32) {
    %c0_i32 = arith.constant 0 : i32
    %c0_i32_0 = arith.constant 0 : i32
    %c0_i32_1 = arith.constant 0 : i32
    return %arg0, %c0_i32, %c0_i32_0 : i32, i32, i32
  }
  func.func @transform_6(%arg0: i32) -> (i32, i32, i32, i32) {
    %c0_i32 = arith.constant 0 : i32
    %c0_i32_0 = arith.constant 0 : i32
    %c0_i32_1 = arith.constant 0 : i32
    %c0_i32_2 = arith.constant 0 : i32
    return %arg0, %c0_i32, %c0_i32_0, %c0_i32_1 : i32, i32, i32, i32
  }
}

</mosaic_0001>

<llo_original>
// kernel: tpu_custom_call.1
$region0: #{tpu_custom_call.1}
  #allocation0 [shape = 'u32[]', space=smem, size = 0x4, offset = 0x4, fixed_abs, tag = 'smem constant byte address 0x4 - core index']
  #allocation1 [shape = 'u32[72,128]{1,0:T(1,128)}', space=vmem, size = 0x9000, scoped, tag = 'internal scratch']
  #allocation2 [shape = 'f32[64,128]{1,0:T(8,128)}', space=vmem, size = 0x8000, scoped, tag = 'scratch operand']
  %s0 = inlined_call_operand.vmem [shape: f32[1,64,32], index: 0, kind: input, shape index: {}]
  %s1 = inlined_call_operand.vmem [shape: f32[32,128], index: 1, kind: input, shape index: {}]
  %s2 = inlined_call_operand.vmem [shape: f32[128,32], index: 2, kind: input, shape index: {}]
  %s3 = inlined_call_operand.vmem [shape: f32[2,128], index: 3, kind: input, shape index: {}]
  %s4 = inlined_call_operand.vmem [shape: f32[8,128], index: 4, kind: input, shape index: {}]
  %s5 = inlined_call_operand.vmem [shape: f32[1,64,32], index: 5, kind: output, shape index: {0}]
  %s6 = inlined_call_operand.hbm [shape: f32[1,2,8,128], index: 6, kind: output, shape index: {1}]
  %7 = xla_tuple %s5, %s6
  %s8 = sld [smem:[#allocation0]]
  $region38: #{tpu_custom_call.1} parent=0
    _
  %s10 = ssub.s32 1, %s8
  %s11 = scalar_select 0, %s10, %s8
  $region1: #{tpu_custom_call.1} parent=0
    #allocation3 [shape = 'u8[8192]{0}', space=vmem, size = 0x2000, scoped, tag = 'output window, operand 1, single buffered']
    #allocation4 [shape = 's32[1]{0}', space=sflag, size = 0x4, scoped, tag = 'scoped memory for tpu_custom_call.1']
    %12 = vsyncpa [#allocation4], 0
    // Predicated region
    $region2: #{tpu_custom_call.1} parent=1 // pred_check
      _
    $region3: #{tpu_custom_call.1} parent=1 // pred_check_branch
      %14 = sbr.rel (0) target = $region5
    $region4: #{tpu_custom_call.1} parent=1 // pred_region
      _
    $region5: #{tpu_custom_call.1} parent=1 // pred_fallthru
      _
    // Predicated region
    $region6: #{tpu_custom_call.1} parent=1 // pred_check
      _
    $region7: #{tpu_custom_call.1} parent=1 // pred_check_branch
      %16 = sbr.rel (0) target = $region9
    $region8: #{tpu_custom_call.1} parent=1 // pred_region
      _
    $region9: #{tpu_custom_call.1} parent=1 // pred_fallthru
      _
    // Predicated region
    $region10: #{tpu_custom_call.1} parent=1 // pred_check
      _
    $region11: #{tpu_custom_call.1} parent=1 // pred_check_branch
      %18 = sbr.rel (0) target = $region13
    $region12: #{tpu_custom_call.1} parent=1 // pred_region
      _
    $region13: #{tpu_custom_call.1} parent=1 // pred_fallthru
      _
    // Predicated region
    $region14: #{tpu_custom_call.1} parent=1 // pred_check
      _
    $region15: #{tpu_custom_call.1} parent=1 // pred_check_branch
      %20 = sbr.rel (0) target = $region17
    $region16: #{tpu_custom_call.1} parent=1 // pred_region
      _
    $region17: #{tpu_custom_call.1} parent=1 // pred_fallthru
      _
    // Predicated region
    $region18: #{tpu_custom_call.1} parent=1 // pred_check
      _
    $region19: #{tpu_custom_call.1} parent=1 // pred_check_branch
      %22 = sbr.rel (0) target = $region21
    $region20: #{tpu_custom_call.1} parent=1 // pred_region
      _
    $region21: #{tpu_custom_call.1} parent=1 // pred_fallthru
      _
    %v23 = vld [vmem:[%s0] sm:$0xff]
    %v24 = vld [vmem:[%s0 + $0x8] sm:$0xff]
    %v25 = vld [vmem:[%s0 + $0x10] sm:$0xff]
    %v26 = vld [vmem:[%s0 + $0x18] sm:$0xff]
    %v27 = vld [vmem:[%s0 + $0x20] sm:$0xff]
    %v28 = vld [vmem:[%s0 + $0x28] sm:$0xff]
    %v29 = vld [vmem:[%s0 + $0x30] sm:$0xff]
    %v30 = vld [vmem:[%s0 + $0x38] sm:$0xff]
    %v31 = vld [vmem:[%s1] sm:$0xff]
    %v32 = vld [vmem:[%s1 + $0x8] sm:$0xff]
    %v33 = vld [vmem:[%s1 + $0x10] sm:$0xff]
    %v34 = vld [vmem:[%s1 + $0x18] sm:$0xff]
    %vm35 = vcmask 261120
    %v37 = vsel %vm35, %v23, 0
    %v40 = vsel %vm35, %v24, 0
    %v43 = vsel %vm35, %v25, 0
    %v46 = vsel %vm35, %v26, 0
    %v49 = vsel %vm35, %v27, 0
    %v52 = vsel %vm35, %v28, 0
    %v55 = vsel %vm35, %v29, 0
    %v58 = vsel %vm35, %v30, 0
    %60 = vmatpush.msra.mxu0 0.0
    %61 = vmatpush.msra.mxu0 0.0
    %62 = vmatpush.msra.mxu0 0.0
    %63 = vmatpush.msra.mxu0 0.0
    %64 = vmatpush.msra.mxu0 0.0
    %65 = vmatpush.msra.mxu0 0.0
    %66 = vmatpush.msra.mxu0 0.0
    %67 = vmatpush.msra.mxu0 0.0
    %68 = vmatpush.msra.mxu0 0.0
    %69 = vmatpush.msra.mxu0 0.0
    %70 = vmatpush.msra.mxu0 0.0
    %71 = vmatpush.msra.mxu0 0.0
    %72 = vmatpush.msra.mxu0 %v34
    %73 = vmatpush.msra.mxu0 %v33
    %74 = vmatpush.msra.mxu0 %v32
    %75 = vmatpush.msra.mxu0 %v31
    %76 = vmatmul.f32.gmra.mxu0 %v37
    %v77 = vpop.f32.mrf.mxu0
    %v78 = vadd.f32 0.0, %v77
    %79 = vmatmul.f32.gmra.mxu0 %v40
    %v80 = vpop.f32.mrf.mxu0
    %v81 = vadd.f32 0.0, %v80
    %82 = vmatmul.f32.gmra.mxu0 %v43
    %v83 = vpop.f32.mrf.mxu0
    %v84 = vadd.f32 0.0, %v83
    %85 = vmatmul.f32.gmra.mxu0 %v46
    %v86 = vpop.f32.mrf.mxu0
    %v87 = vadd.f32 0.0, %v86
    %88 = vmatmul.f32.gmra.mxu0 %v49
    %v89 = vpop.f32.mrf.mxu0
    %v90 = vadd.f32 0.0, %v89
    %91 = vmatmul.f32.gmra.mxu0 %v52
    %v92 = vpop.f32.mrf.mxu0
    %v93 = vadd.f32 0.0, %v92
    %94 = vmatmul.f32.gmra.mxu0 %v55
    %v95 = vpop.f32.mrf.mxu0
    %v96 = vadd.f32 0.0, %v95
    %97 = vmatmul.f32.gmra.mxu0 %v58
    %v98 = vpop.f32.mrf.mxu0
    %v99 = vadd.f32 0.0, %v98
    %100 = vdwg.mxu0
    %101 = vst [vmem:[#allocation2] sm:$0xff] %v78
    %102 = vst [vmem:[#allocation2 + $0x8] sm:$0xff] %v81
    %103 = vst [vmem:[#allocation2 + $0x10] sm:$0xff] %v84
    %104 = vst [vmem:[#allocation2 + $0x18] sm:$0xff] %v87
    %105 = vst [vmem:[#allocation2 + $0x20] sm:$0xff] %v90
    %106 = vst [vmem:[#allocation2 + $0x28] sm:$0xff] %v93
    %107 = vst [vmem:[#allocation2 + $0x30] sm:$0xff] %v96
    %108 = vst [vmem:[#allocation2 + $0x38] sm:$0xff] %v99
    %v109 = vld [vmem:[%s3] sm:$0x3]
    %v110 = vperm.slane %v109, 0
    %v111 = vperm.slane %v109, 1
    %v112 = vld [vmem:[%s4] sm:$0xff]
    %v113 = vld [vmem:[#allocation2] sm:$0xff]
    %v114 = vmul.f32 %v110, %v112
    %v115 = vmul.f32 %v111, 0.0
    %v116 = vsub.f32 %v114, %v115
    %v117 = vadd.f32 %v116, %v113
    %v118 = vmul.f32 %v110, 0.0
    %v119 = vmul.f32 %v111, %v112
    %v120 = vadd.f32 %v118, %v119
    %121 = vst [vmem:[#allocation2] sm:$0xff] %v117
    %s122 = scalar_lea.vmem [#allocation2], 8
    %v123 = vld [vmem:[%s122] sm:$0xff]
    %v124 = vmul.f32 %v110, %v117
    %v125 = vmul.f32 %v111, %v120
    %v126 = vsub.f32 %v124, %v125
    %v127 = vadd.f32 %v126, %v123
    %v128 = vmul.f32 %v110, %v120
    %v129 = vmul.f32 %v111, %v117
    %v130 = vadd.f32 %v128, %v129
    %131 = vst [vmem:[%s122] sm:$0xff] %v127
    %s132 = scalar_lea.vmem [#allocation2], 16
    %v133 = vld [vmem:[%s132] sm:$0xff]
    %v134 = vmul.f32 %v110, %v127
    %v135 = vmul.f32 %v111, %v130
    %v136 = vsub.f32 %v134, %v135
    %v137 = vadd.f32 %v136, %v133
    %v138 = vmul.f32 %v110, %v130
    %v139 = vmul.f32 %v111, %v127
    %v140 = vadd.f32 %v138, %v139
    %141 = vst [vmem:[%s132] sm:$0xff] %v137
    %s142 = scalar_lea.vmem [#allocation2], 24
    %v143 = vld [vmem:[%s142] sm:$0xff]
    %v144 = vmul.f32 %v110, %v137
    %v145 = vmul.f32 %v111, %v140
    %v146 = vsub.f32 %v144, %v145
    %v147 = vadd.f32 %v146, %v143
    %v148 = vmul.f32 %v110, %v140
    %v149 = vmul.f32 %v111, %v137
    %v150 = vadd.f32 %v148, %v149
    %151 = vst [vmem:[%s142] sm:$0xff] %v147
    %s152 = scalar_lea.vmem [#allocation2], 32
    %v153 = vld [vmem:[%s152] sm:$0xff]
    %v154 = vmul.f32 %v110, %v147
    %v155 = vmul.f32 %v111, %v150
    %v156 = vsub.f32 %v154, %v155
    %v157 = vadd.f32 %v156, %v153
    %v158 = vmul.f32 %v110, %v150
    %v159 = vmul.f32 %v111, %v147
    %v160 = vadd.f32 %v158, %v159
    %161 = vst [vmem:[%s152] sm:$0xff] %v157
    %s162 = scalar_lea.vmem [#allocation2], 40
    %v163 = vld [vmem:[%s162] sm:$0xff]
    %v164 = vmul.f32 %v110, %v157
    %v165 = vmul.f32 %v111, %v160
    %v166 = vsub.f32 %v164, %v165
    %v167 = vadd.f32 %v166, %v163
    %v168 = vmul.f32 %v110, %v160
    %v169 = vmul.f32 %v111, %v157
    %v170 = vadd.f32 %v168, %v169
    %171 = vst [vmem:[%s162] sm:$0xff] %v167
    %s172 = scalar_lea.vmem [#allocation2], 48
    %v173 = vld [vmem:[%s172] sm:$0xff]
    %v174 = vmul.f32 %v110, %v167
    %v175 = vmul.f32 %v111, %v170
    %v176 = vsub.f32 %v174, %v175
    %v177 = vadd.f32 %v176, %v173
    %v178 = vmul.f32 %v110, %v170
    %v179 = vmul.f32 %v111, %v167
    %v180 = vadd.f32 %v178, %v179
    %181 = vst [vmem:[%s172] sm:$0xff] %v177
    %s182 = scalar_lea.vmem [#allocation2], 56
    %v183 = vld [vmem:[%s182] sm:$0xff]
    %v184 = vmul.f32 %v110, %v177
    %v185 = vmul.f32 %v111, %v180
    %v186 = vsub.f32 %v184, %v185
    %v187 = vadd.f32 %v186, %v183
    %v188 = vmul.f32 %v110, %v180
    %v189 = vmul.f32 %v111, %v177
    %v190 = vadd.f32 %v188, %v189
    %191 = vst [vmem:[%s182] sm:$0xff] %v187
    %v192 = vld [vmem:[#allocation2] sm:$0xff]
    %v193 = vld [vmem:[#allocation2 + $0x8] sm:$0xff]
    %v194 = vld [vmem:[#allocation2 + $0x10] sm:$0xff]
    %v195 = vld [vmem:[#allocation2 + $0x18] sm:$0xff]
    %v196 = vld [vmem:[#allocation2 + $0x20] sm:$0xff]
    %v197 = vld [vmem:[#allocation2 + $0x28] sm:$0xff]
    %v198 = vld [vmem:[#allocation2 + $0x30] sm:$0xff]
    %v199 = vld [vmem:[#allocation2 + $0x38] sm:$0xff]
    %v200 = vld [vmem:[%s2] sm:$0xff]
    %v201 = vld [vmem:[%s2 + $0x8] sm:$0xff]
    %v202 = vld [vmem:[%s2 + $0x10] sm:$0xff]
    %v203 = vld [vmem:[%s2 + $0x18] sm:$0xff]
    %v204 = vld [vmem:[%s2 + $0x20] sm:$0xff]
    %v205 = vld [vmem:[%s2 + $0x28] sm:$0xff]
    %v206 = vld [vmem:[%s2 + $0x30] sm:$0xff]
    %v207 = vld [vmem:[%s2 + $0x38] sm:$0xff]
    %v208 = vld [vmem:[%s2 + $0x40] sm:$0xff]
    %v209 = vld [vmem:[%s2 + $0x48] sm:$0xff]
    %v210 = vld [vmem:[%s2 + $0x50] sm:$0xff]
    %v211 = vld [vmem:[%s2 + $0x58] sm:$0xff]
    %v212 = vld [vmem:[%s2 + $0x60] sm:$0xff]
    %v213 = vld [vmem:[%s2 + $0x68] sm:$0xff]
    %v214 = vld [vmem:[%s2 + $0x70] sm:$0xff]
    %v215 = vld [vmem:[%s2 + $0x78] sm:$0xff]
    %216 = vmatpush.msra.mxu0 %v215
    %217 = vmatpush.msra.mxu0 %v214
    %218 = vmatpush.msra.mxu0 %v213
    %219 = vmatpush.msra.mxu0 %v212
    %220 = vmatpush.msra.mxu0 %v211
    %221 = vmatpush.msra.mxu0 %v210
    %222 = vmatpush.msra.mxu0 %v209
    %223 = vmatpush.msra.mxu0 %v208
    %224 = vmatpush.msra.mxu0 %v207
    %225 = vmatpush.msra.mxu0 %v206
    %226 = vmatpush.msra.mxu0 %v205
    %227 = vmatpush.msra.mxu0 %v204
    %228 = vmatpush.msra.mxu0 %v203
    %229 = vmatpush.msra.mxu0 %v202
    %230 = vmatpush.msra.mxu0 %v201
    %231 = vmatpush.msra.mxu0 %v200
    %232 = vmatmul.f32.gmra.mxu0 %v192
    %v233 = vpop.f32.mrf.mxu0
    %v234 = vadd.f32 0.0, %v233
    %235 = vmatmul.f32.gmra.mxu0 %v193
    %v236 = vpop.f32.mrf.mxu0
    %v237 = vadd.f32 0.0, %v236
    %238 = vmatmul.f32.gmra.mxu0 %v194
    %v239 = vpop.f32.mrf.mxu0
    %v240 = vadd.f32 0.0, %v239
    %241 = vmatmul.f32.gmra.mxu0 %v195
    %v242 = vpop.f32.mrf.mxu0
    %v243 = vadd.f32 0.0, %v242
    %244 = vmatmul.f32.gmra.mxu0 %v196
    %v245 = vpop.f32.mrf.mxu0
    %v246 = vadd.f32 0.0, %v245
    %247 = vmatmul.f32.gmra.mxu0 %v197
    %v248 = vpop.f32.mrf.mxu0
    %v249 = vadd.f32 0.0, %v248
    %250 = vmatmul.f32.gmra.mxu0 %v198
    %v251 = vpop.f32.mrf.mxu0
    %v252 = vadd.f32 0.0, %v251
    %253 = vmatmul.f32.gmra.mxu0 %v199
    %v254 = vpop.f32.mrf.mxu0
    %v255 = vadd.f32 0.0, %v254
    %256 = vdwg.mxu0
    %257 = vst.msk [vmem:[%s5] sm:$0xff] %vm35, %v234
    %258 = vst.msk [vmem:[%s5 + $0x8] sm:$0xff] %vm35, %v237
    %259 = vst.msk [vmem:[%s5 + $0x10] sm:$0xff] %vm35, %v240
    %260 = vst.msk [vmem:[%s5 + $0x18] sm:$0xff] %vm35, %v243
    %261 = vst.msk [vmem:[%s5 + $0x20] sm:$0xff] %vm35, %v246
    %262 = vst.msk [vmem:[%s5 + $0x28] sm:$0xff] %vm35, %v249
    %263 = vst.msk [vmem:[%s5 + $0x30] sm:$0xff] %vm35, %v252
    %264 = vst.msk [vmem:[%s5 + $0x38] sm:$0xff] %vm35, %v255
    %265 = vst [vmem:[#allocation3] sm:$0xff] %v187
    %s266 = scalar_lea.vmem [#allocation3], 8
    %267 = vst [vmem:[%s266] sm:$0xff] %v190
    // Predicated region
    $region22: #{tpu_custom_call.1} parent=1 // pred_check
      _
    $region23: #{tpu_custom_call.1} parent=1 // pred_check_branch
      %269 = sbr.rel (0) target = $region25
    $region24: #{tpu_custom_call.1} parent=1 // pred_region
      _
    $region25: #{tpu_custom_call.1} parent=1 // pred_fallthru
      _
    // Predicated region
    $region26: #{tpu_custom_call.1} parent=1 // pred_check
      _
    $region27: #{tpu_custom_call.1} parent=1 // pred_check_branch
      %271 = sbr.rel (0) target = $region29
    $region28: #{tpu_custom_call.1} parent=1 // pred_region
      %273 = vsyncadd [#allocation4], 0
      %s274 = sshll.u32 [#allocation3], 4
      %s275 = int_to_ptr.vmem [resolvable:$true] %s274
      %s276 = sshll.u32 %s6, 4
      %s277 = int_to_ptr.hbm [resolvable:$true] %s276
      %282 = dma.vmem_to_hbm [thread:$0]  %s275, 256, %s277, [#allocation4], 128, 128, 8
    $region29: #{tpu_custom_call.1} parent=1 // pred_fallthru
      _
    // Predicated region
    $region30: #{tpu_custom_call.1} parent=1 // pred_check
      _
    $region31: #{tpu_custom_call.1} parent=1 // pred_check_branch
      %284 = sbr.rel (0) target = $region33
    $region32: #{tpu_custom_call.1} parent=1 // pred_region
      _
    $region33: #{tpu_custom_call.1} parent=1 // pred_fallthru
      _
    // Predicated region
    $region34: #{tpu_custom_call.1} parent=1 // pred_check
      _
    $region35: #{tpu_custom_call.1} parent=1 // pred_check_branch
      %286 = sbr.rel (0) target = $region37
    $region36: #{tpu_custom_call.1} parent=1 // pred_region
      %288 = dma.done [#allocation4], 256
    $region37: #{tpu_custom_call.1} parent=1 // pred_fallthru
      _
    %289 = vsyncpa [#allocation4], 1

</llo_original>
